<compile_context>
chip_gen: v7x
topology: tpu7x:2x2x1
jax: 0.10.0
libtpu: 0.0.40
codegen_flags: <defaults>
</compile_context>

<pallas_src>
import jax
import jax.numpy as jnp
from jax.experimental import pallas as pl
from jax.experimental.pallas import tpu as pltpu


_LAYER_DIMS = [64, 32, 16, 8, 4, 2]  # output widths of fc1..fc6


def _round_up(n, m):
    return ((n + m - 1) // m) * m


def banknet_kernel(x_ref,
                   w1_ref, b1_ref,
                   w2_ref, b2_ref,
                   w3_ref, b3_ref,
                   w4_ref, b4_ref,
                   w5_ref, b5_ref,
                   w6_ref, b6_ref,
                   out_ref):
    # x_ref: [F, TB] (batch on the lane axis).
    # wN_ref: torch-layout [out, in] f32; bN_ref: [out, 1] f32.
    h = x_ref[...].astype(jnp.float32)

    def dense(h, w_ref, b_ref):
        # [out, in] @ [in, TB] -> [out, TB]; f32 accumulation on the MXU.
        return jnp.dot(w_ref[...], h, preferred_element_type=jnp.float32) + b_ref[...]

    h = jnp.maximum(dense(h, w1_ref, b1_ref), 0.0)   # [64, TB]
    h = jnp.maximum(dense(h, w2_ref, b2_ref), 0.0)   # [32, TB]
    h = jnp.maximum(dense(h, w3_ref, b3_ref), 0.0)   # [16, TB]
    h = jnp.maximum(dense(h, w4_ref, b4_ref), 0.0)   # [ 8, TB]
    h = jnp.maximum(dense(h, w5_ref, b5_ref), 0.0)   # [ 4, TB]
    h = dense(h, w6_ref, b6_ref)                     # [ 2, TB] logits

    out_ref[...] = h.astype(out_ref.dtype)           # lane-dense [2, TB] store


def banknet_forward(x, params, *, tb_max=1024, input_dtype=jnp.float32):
    """x: [B, num_features] (or [B, ...], flattened). params: torch-style list of
    (W[out, in], b[out]). Returns [B, 2] f32 logits (same semantics as BankNet)."""
    B = x.shape[0]
    x2 = x.reshape(B, -1)                   # torch.flatten(x, 1)
    F = x2.shape[1]

    # Batch tile: lane dim must be a multiple of 128 (or the full dim).
    TB = min(tb_max, _round_up(B, 128))
    B_pad = _round_up(B, TB)

    # Pad the batch and transpose to [F, B_pad] so batch sits on the lane axis.
    xt = jnp.pad(x2, ((0, B_pad - B), (0, 0))).T.astype(input_dtype)

    flat_args = [xt]
    in_specs = [pl.BlockSpec((F, TB), lambda i: (0, i))]
    for W, b in params:
        W = jnp.asarray(W, jnp.float32)               # [out, in]
        b = jnp.asarray(b, jnp.float32)[:, None]      # [out, 1]
        flat_args += [W, b]
        # Constant index_maps -> weights/biases stay resident across grid steps.
        in_specs += [pl.BlockSpec(W.shape, lambda i: (0, 0)),
                     pl.BlockSpec(b.shape, lambda i: (0, 0))]

    dims = [F] + _LAYER_DIMS
    flops = 2 * B_pad * sum(dims[i] * dims[i + 1] for i in range(6))
    weight_bytes = sum((int(jnp.asarray(w).size) + int(jnp.asarray(bb).size)) * 4
                       for w, bb in params)
    bytes_accessed = (B_pad * F * jnp.dtype(input_dtype).itemsize
                      + weight_bytes + B_pad * 2 * 4)

    out_t = pl.pallas_call(
        banknet_kernel,
        out_shape=jax.ShapeDtypeStruct((2, B_pad), jnp.float32),
        grid=(B_pad // TB,),
        in_specs=in_specs,
        out_specs=pl.BlockSpec((2, TB), lambda i: (0, i)),
        compiler_params=pltpu.CompilerParams(
            dimension_semantics=("parallel",)),
        cost_estimate=pl.CostEstimate(flops=flops, transcendentals=0,
                                      bytes_accessed=bytes_accessed),
    )(*flat_args)

    # Undo the lane-dense layout and the batch padding in the wrapper.
    return out_t[:, :B].T                    # [B, 2]


def init_banknet_params(key, num_of_features):
    """Deterministic init matching BankNet's layer shapes (torch-style W[out,in],
    b[out]); uniform(-1/sqrt(fan_in), 1/sqrt(fan_in)) like nn.Linear."""
    dims = [num_of_features] + _LAYER_DIMS
    params = []
    for i in range(6):
        fan_in, fan_out = dims[i], dims[i + 1]
        key, kw, kb = jax.random.split(key, 3)
        bound = 1.0 / jnp.sqrt(fan_in)
        W = jax.random.uniform(kw, (fan_out, fan_in), jnp.float32, -bound, bound)
        b = jax.random.uniform(kb, (fan_out,), jnp.float32, -bound, bound)
        params.append((W, b))
    return params


def banknet_reference(x, params):
    """Plain-JAX reference of the torch forward for verification."""
    h = x.reshape(x.shape[0], -1)
    for i, (W, b) in enumerate(params):
        h = h @ W.T + b
        if i < 5:
            h = jnp.maximum(h, 0.0)
    return h


if __name__ == "__main__":
    key = jax.random.PRNGKey(0)
    num_of_features = 16
    batch = 8

    kx, kp = jax.random.split(key)
    x = jax.random.normal(kx, (batch, num_of_features), jnp.float32)
    params = init_banknet_params(kp, num_of_features)

    out = banknet_forward(x, params)
    out = jax.block_until_ready(out)

    ref = banknet_reference(x, params)

    assert out.shape == (batch, 2), out.shape
    assert jnp.allclose(out, ref, atol=1e-4, rtol=1e-4), (out, ref)

    print("KERNEL_OK")
</pallas_src>

<mosaic_0001>
module attributes {stable_mosaic.version = 11 : i64} {
  func.func @banknet_kernel(%arg0: i32, %arg1: memref<16x128xf32, #tpu.memory_space<vmem>>, %arg2: memref<64x16xf32, #tpu.memory_space<vmem>>, %arg3: memref<64x1xf32, #tpu.memory_space<vmem>>, %arg4: memref<32x64xf32, #tpu.memory_space<vmem>>, %arg5: memref<32x1xf32, #tpu.memory_space<vmem>>, %arg6: memref<16x32xf32, #tpu.memory_space<vmem>>, %arg7: memref<16x1xf32, #tpu.memory_space<vmem>>, %arg8: memref<8x16xf32, #tpu.memory_space<vmem>>, %arg9: memref<8x1xf32, #tpu.memory_space<vmem>>, %arg10: memref<4x8xf32, #tpu.memory_space<vmem>>, %arg11: memref<4x1xf32, #tpu.memory_space<vmem>>, %arg12: memref<2x4xf32, #tpu.memory_space<vmem>>, %arg13: memref<2x1xf32, #tpu.memory_space<vmem>>, %arg14: memref<2x128xf32, #tpu.memory_space<vmem>>) attributes {dimension_semantics = [#tpu.dimension_semantics<parallel>], iteration_bounds = array<i64: 1>, scalar_prefetch = 0 : i64, scratch_operands = 0 : i64, tpu.core_type = #tpu.core_type<tc>, window_params = [{transform_indices = @transform_0, window_bounds = array<i64: 16, 128>}, {pipeline_mode = #tpu.pipeline_mode<synchronous>, transform_indices = @transform_1, window_bounds = array<i64: 64, 16>}, {pipeline_mode = #tpu.pipeline_mode<synchronous>, transform_indices = @transform_2, window_bounds = array<i64: 64, 1>}, {pipeline_mode = #tpu.pipeline_mode<synchronous>, transform_indices = @transform_3, window_bounds = array<i64: 32, 64>}, {pipeline_mode = #tpu.pipeline_mode<synchronous>, transform_indices = @transform_4, window_bounds = array<i64: 32, 1>}, {pipeline_mode = #tpu.pipeline_mode<synchronous>, transform_indices = @transform_5, window_bounds = array<i64: 16, 32>}, {pipeline_mode = #tpu.pipeline_mode<synchronous>, transform_indices = @transform_6, window_bounds = array<i64: 16, 1>}, {pipeline_mode = #tpu.pipeline_mode<synchronous>, transform_indices = @transform_7, window_bounds = array<i64: 8, 16>}, {pipeline_mode = #tpu.pipeline_mode<synchronous>, transform_indices = @transform_8, window_bounds = array<i64: 8, 1>}, {pipeline_mode = #tpu.pipeline_mode<synchronous>, transform_indices = @transform_9, window_bounds = array<i64: 4, 8>}, {pipeline_mode = #tpu.pipeline_mode<synchronous>, transform_indices = @transform_10, window_bounds = array<i64: 4, 1>}, {pipeline_mode = #tpu.pipeline_mode<synchronous>, transform_indices = @transform_11, window_bounds = array<i64: 2, 4>}, {pipeline_mode = #tpu.pipeline_mode<synchronous>, transform_indices = @transform_12, window_bounds = array<i64: 2, 1>}, {transform_indices = @transform_13, window_bounds = array<i64: 2, 128>}]} {
    %c0 = arith.constant 0 : index
    %c0_0 = arith.constant 0 : index
    %0 = vector.load %arg1[%c0, %c0_0] : memref<16x128xf32, #tpu.memory_space<vmem>>, vector<16x128xf32>
    %c0_1 = arith.constant 0 : index
    %c0_2 = arith.constant 0 : index
    %1 = vector.load %arg2[%c0_1, %c0_2] : memref<64x16xf32, #tpu.memory_space<vmem>>, vector<64x16xf32>
    %cst = arith.constant dense<0.000000e+00> : vector<64x128xf32>
    %2 = tpu.matmul %1, %0, %cst {dimension_numbers = #tpu.dot_dimension_numbers<[1], [0], [0], [1], [0, 0, 1, 1], [], []>} : vector<64x16xf32>, vector<16x128xf32>, vector<64x128xf32> -> vector<64x128xf32>
    %c0_3 = arith.constant 0 : index
    %c0_4 = arith.constant 0 : index
    %3 = vector.load %arg3[%c0_3, %c0_4] : memref<64x1xf32, #tpu.memory_space<vmem>>, vector<64x1xf32>
    %4 = vector.broadcast %3 : vector<64x1xf32> to vector<64x128xf32>
    %5 = arith.addf %2, %4 : vector<64x128xf32>
    %cst_5 = arith.constant 0.000000e+00 : f32
    %6 = vector.broadcast %cst_5 : f32 to vector<64x128xf32>
    %7 = arith.maximumf %5, %6 : vector<64x128xf32>
    %c0_6 = arith.constant 0 : index
    %c0_7 = arith.constant 0 : index
    %8 = vector.load %arg4[%c0_6, %c0_7] : memref<32x64xf32, #tpu.memory_space<vmem>>, vector<32x64xf32>
    %cst_8 = arith.constant dense<0.000000e+00> : vector<32x128xf32>
    %9 = tpu.matmul %8, %7, %cst_8 {dimension_numbers = #tpu.dot_dimension_numbers<[1], [0], [0], [1], [0, 0, 1, 1], [], []>} : vector<32x64xf32>, vector<64x128xf32>, vector<32x128xf32> -> vector<32x128xf32>
    %c0_9 = arith.constant 0 : index
    %c0_10 = arith.constant 0 : index
    %10 = vector.load %arg5[%c0_9, %c0_10] : memref<32x1xf32, #tpu.memory_space<vmem>>, vector<32x1xf32>
    %11 = vector.broadcast %10 : vector<32x1xf32> to vector<32x128xf32>
    %12 = arith.addf %9, %11 : vector<32x128xf32>
    %cst_11 = arith.constant 0.000000e+00 : f32
    %13 = vector.broadcast %cst_11 : f32 to vector<32x128xf32>
    %14 = arith.maximumf %12, %13 : vector<32x128xf32>
    %c0_12 = arith.constant 0 : index
    %c0_13 = arith.constant 0 : index
    %15 = vector.load %arg6[%c0_12, %c0_13] : memref<16x32xf32, #tpu.memory_space<vmem>>, vector<16x32xf32>
    %cst_14 = arith.constant dense<0.000000e+00> : vector<16x128xf32>
    %16 = tpu.matmul %15, %14, %cst_14 {dimension_numbers = #tpu.dot_dimension_numbers<[1], [0], [0], [1], [0, 0, 1, 1], [], []>} : vector<16x32xf32>, vector<32x128xf32>, vector<16x128xf32> -> vector<16x128xf32>
    %c0_15 = arith.constant 0 : index
    %c0_16 = arith.constant 0 : index
    %17 = vector.load %arg7[%c0_15, %c0_16] : memref<16x1xf32, #tpu.memory_space<vmem>>, vector<16x1xf32>
    %18 = vector.broadcast %17 : vector<16x1xf32> to vector<16x128xf32>
    %19 = arith.addf %16, %18 : vector<16x128xf32>
    %cst_17 = arith.constant 0.000000e+00 : f32
    %20 = vector.broadcast %cst_17 : f32 to vector<16x128xf32>
    %21 = arith.maximumf %19, %20 : vector<16x128xf32>
    %c0_18 = arith.constant 0 : index
    %c0_19 = arith.constant 0 : index
    %22 = vector.load %arg8[%c0_18, %c0_19] : memref<8x16xf32, #tpu.memory_space<vmem>>, vector<8x16xf32>
    %cst_20 = arith.constant dense<0.000000e+00> : vector<8x128xf32>
    %23 = tpu.matmul %22, %21, %cst_20 {dimension_numbers = #tpu.dot_dimension_numbers<[1], [0], [0], [1], [0, 0, 1, 1], [], []>} : vector<8x16xf32>, vector<16x128xf32>, vector<8x128xf32> -> vector<8x128xf32>
    %c0_21 = arith.constant 0 : index
    %c0_22 = arith.constant 0 : index
    %24 = vector.load %arg9[%c0_21, %c0_22] : memref<8x1xf32, #tpu.memory_space<vmem>>, vector<8x1xf32>
    %25 = vector.broadcast %24 : vector<8x1xf32> to vector<8x128xf32>
    %26 = arith.addf %23, %25 : vector<8x128xf32>
    %cst_23 = arith.constant 0.000000e+00 : f32
    %27 = vector.broadcast %cst_23 : f32 to vector<8x128xf32>
    %28 = arith.maximumf %26, %27 : vector<8x128xf32>
    %c0_24 = arith.constant 0 : index
    %c0_25 = arith.constant 0 : index
    %29 = vector.load %arg10[%c0_24, %c0_25] : memref<4x8xf32, #tpu.memory_space<vmem>>, vector<4x8xf32>
    %cst_26 = arith.constant dense<0.000000e+00> : vector<4x128xf32>
    %30 = tpu.matmul %29, %28, %cst_26 {dimension_numbers = #tpu.dot_dimension_numbers<[1], [0], [0], [1], [0, 0, 1, 1], [], []>} : vector<4x8xf32>, vector<8x128xf32>, vector<4x128xf32> -> vector<4x128xf32>
    %c0_27 = arith.constant 0 : index
    %c0_28 = arith.constant 0 : index
    %31 = vector.load %arg11[%c0_27, %c0_28] : memref<4x1xf32, #tpu.memory_space<vmem>>, vector<4x1xf32>
    %32 = vector.broadcast %31 : vector<4x1xf32> to vector<4x128xf32>
    %33 = arith.addf %30, %32 : vector<4x128xf32>
    %cst_29 = arith.constant 0.000000e+00 : f32
    %34 = vector.broadcast %cst_29 : f32 to vector<4x128xf32>
    %35 = arith.maximumf %33, %34 : vector<4x128xf32>
    %c0_30 = arith.constant 0 : index
    %c0_31 = arith.constant 0 : index
    %36 = vector.load %arg12[%c0_30, %c0_31] : memref<2x4xf32, #tpu.memory_space<vmem>>, vector<2x4xf32>
    %cst_32 = arith.constant dense<0.000000e+00> : vector<2x128xf32>
    %37 = tpu.matmul %36, %35, %cst_32 {dimension_numbers = #tpu.dot_dimension_numbers<[1], [0], [0], [1], [0, 0, 1, 1], [], []>} : vector<2x4xf32>, vector<4x128xf32>, vector<2x128xf32> -> vector<2x128xf32>
    %c0_33 = arith.constant 0 : index
    %c0_34 = arith.constant 0 : index
    %38 = vector.load %arg13[%c0_33, %c0_34] : memref<2x1xf32, #tpu.memory_space<vmem>>, vector<2x1xf32>
    %39 = vector.broadcast %38 : vector<2x1xf32> to vector<2x128xf32>
    %40 = arith.addf %37, %39 : vector<2x128xf32>
    %c0_35 = arith.constant 0 : index
    %c0_36 = arith.constant 0 : index
    %41 = vector.load %arg14[%c0_35, %c0_36] : memref<2x128xf32, #tpu.memory_space<vmem>>, vector<2x128xf32>
    tpu.vector_store %arg14[%c0_35, %c0_36], %40 {strides = array<i32>} : memref<2x128xf32, #tpu.memory_space<vmem>>, vector<2x128xf32>,
    return
  }
  func.func @transform_0(%arg0: i32) -> (i32, i32) {
    %c0_i32 = arith.constant 0 : i32
    %c0_i32_0 = arith.constant 0 : i32
    return %c0_i32, %arg0 : i32, i32
  }
  func.func @transform_1(%arg0: i32) -> (i32, i32) {
    %c0_i32 = arith.constant 0 : i32
    %c0_i32_0 = arith.constant 0 : i32
    %c0_i32_1 = arith.constant 0 : i32
    return %c0_i32, %c0_i32_0 : i32, i32
  }
  func.func @transform_2(%arg0: i32) -> (i32, i32) {
    %c0_i32 = arith.constant 0 : i32
    %c0_i32_0 = arith.constant 0 : i32
    %c0_i32_1 = arith.constant 0 : i32
    return %c0_i32, %c0_i32_0 : i32, i32
  }
  func.func @transform_3(%arg0: i32) -> (i32, i32) {
    %c0_i32 = arith.constant 0 : i32
    %c0_i32_0 = arith.constant 0 : i32
    %c0_i32_1 = arith.constant 0 : i32
    return %c0_i32, %c0_i32_0 : i32, i32
  }
  func.func @transform_4(%arg0: i32) -> (i32, i32) {
    %c0_i32 = arith.constant 0 : i32
    %c0_i32_0 = arith.constant 0 : i32
    %c0_i32_1 = arith.constant 0 : i32
    return %c0_i32, %c0_i32_0 : i32, i32
  }
  func.func @transform_5(%arg0: i32) -> (i32, i32) {
    %c0_i32 = arith.constant 0 : i32
    %c0_i32_0 = arith.constant 0 : i32
    %c0_i32_1 = arith.constant 0 : i32
    return %c0_i32, %c0_i32_0 : i32, i32
  }
  func.func @transform_6(%arg0: i32) -> (i32, i32) {
    %c0_i32 = arith.constant 0 : i32
    %c0_i32_0 = arith.constant 0 : i32
    %c0_i32_1 = arith.constant 0 : i32
    return %c0_i32, %c0_i32_0 : i32, i32
  }
  func.func @transform_7(%arg0: i32) -> (i32, i32) {
    %c0_i32 = arith.constant 0 : i32
    %c0_i32_0 = arith.constant 0 : i32
    %c0_i32_1 = arith.constant 0 : i32
    return %c0_i32, %c0_i32_0 : i32, i32
  }
  func.func @transform_8(%arg0: i32) -> (i32, i32) {
    %c0_i32 = arith.constant 0 : i32
    %c0_i32_0 = arith.constant 0 : i32
    %c0_i32_1 = arith.constant 0 : i32
    return %c0_i32, %c0_i32_0 : i32, i32
  }
  func.func @transform_9(%arg0: i32) -> (i32, i32) {
    %c0_i32 = arith.constant 0 : i32
    %c0_i32_0 = arith.constant 0 : i32
    %c0_i32_1 = arith.constant 0 : i32
    return %c0_i32, %c0_i32_0 : i32, i32
  }
  func.func @transform_10(%arg0: i32) -> (i32, i32) {
    %c0_i32 = arith.constant 0 : i32
    %c0_i32_0 = arith.constant 0 : i32
    %c0_i32_1 = arith.constant 0 : i32
    return %c0_i32, %c0_i32_0 : i32, i32
  }
  func.func @transform_11(%arg0: i32) -> (i32, i32) {
    %c0_i32 = arith.constant 0 : i32
    %c0_i32_0 = arith.constant 0 : i32
    %c0_i32_1 = arith.constant 0 : i32
    return %c0_i32, %c0_i32_0 : i32, i32
  }
  func.func @transform_12(%arg0: i32) -> (i32, i32) {
    %c0_i32 = arith.constant 0 : i32
    %c0_i32_0 = arith.constant 0 : i32
    %c0_i32_1 = arith.constant 0 : i32
    return %c0_i32, %c0_i32_0 : i32, i32
  }
  func.func @transform_13(%arg0: i32) -> (i32, i32) {
    %c0_i32 = arith.constant 0 : i32
    %c0_i32_0 = arith.constant 0 : i32
    return %c0_i32, %arg0 : i32, i32
  }
}

</mosaic_0001>

<llo_original>
// kernel: tpu_custom_call.1
$region0: #{tpu_custom_call.1}
  #allocation0 [shape = 'u32[]', space=smem, size = 0x4, offset = 0x4, fixed_abs, tag = 'smem constant byte address 0x4 - core index']
  #allocation1 [shape = 'u32[144,128]{1,0:T(1,128)}', space=vmem, size = 0x12000, scoped, tag = 'internal scratch']
  %s0 = inlined_call_operand.vmem [shape: f32[16,128], index: 0, kind: input, shape index: {}]
  %s1 = inlined_call_operand.vmem [shape: f32[64,16], index: 1, kind: input, shape index: {}]
  %s2 = inlined_call_operand.vmem [shape: f32[64,1], index: 2, kind: input, shape index: {}]
  %s3 = inlined_call_operand.vmem [shape: f32[32,64], index: 3, kind: input, shape index: {}]
  %s4 = inlined_call_operand.vmem [shape: f32[32,1], index: 4, kind: input, shape index: {}]
  %s5 = inlined_call_operand.vmem [shape: f32[16,32], index: 5, kind: input, shape index: {}]
  %s6 = inlined_call_operand.vmem [shape: f32[16,1], index: 6, kind: input, shape index: {}]
  %s7 = inlined_call_operand.vmem [shape: f32[8,16], index: 7, kind: input, shape index: {}]
  %s8 = inlined_call_operand.vmem [shape: f32[8,1], index: 8, kind: input, shape index: {}]
  %s9 = inlined_call_operand.vmem [shape: f32[4,8], index: 9, kind: input, shape index: {}]
  %s10 = inlined_call_operand.vmem [shape: f32[4,1], index: 10, kind: input, shape index: {}]
  %s11 = inlined_call_operand.vmem [shape: f32[2,4], index: 11, kind: input, shape index: {}]
  %s12 = inlined_call_operand.vmem [shape: f32[2,1], index: 12, kind: input, shape index: {}]
  %s13 = inlined_call_operand.hbm [shape: f32[2,128], index: 13, kind: output, shape index: {}]
  %s14 = sld [smem:[#allocation0]]
  $region62: #{tpu_custom_call.1} parent=0
    _
  %s16 = ssub.s32 1, %s14
  %s17 = scalar_select 0, %s16, %s14
  $region1: #{tpu_custom_call.1} parent=0
    #allocation2 [shape = 'u8[1024]{0}', space=vmem, size = 0x400, scoped, tag = 'output window, operand 0, single buffered']
    #allocation3 [shape = 's32[1]{0}', space=sflag, size = 0x4, scoped, tag = 'scoped memory for tpu_custom_call.1']
    %18 = vsyncpa [#allocation3], 0
    // Predicated region
    $region2: #{tpu_custom_call.1} parent=1 // pred_check
      _
    $region3: #{tpu_custom_call.1} parent=1 // pred_check_branch
      %20 = sbr.rel (0) target = $region5
    $region4: #{tpu_custom_call.1} parent=1 // pred_region
      _
    $region5: #{tpu_custom_call.1} parent=1 // pred_fallthru
      _
    // Predicated region
    $region6: #{tpu_custom_call.1} parent=1 // pred_check
      _
    $region7: #{tpu_custom_call.1} parent=1 // pred_check_branch
      %22 = sbr.rel (0) target = $region9
    $region8: #{tpu_custom_call.1} parent=1 // pred_region
      _
    $region9: #{tpu_custom_call.1} parent=1 // pred_fallthru
      _
    // Predicated region
    $region10: #{tpu_custom_call.1} parent=1 // pred_check
      _
    $region11: #{tpu_custom_call.1} parent=1 // pred_check_branch
      %24 = sbr.rel (0) target = $region13
    $region12: #{tpu_custom_call.1} parent=1 // pred_region
      _
    $region13: #{tpu_custom_call.1} parent=1 // pred_fallthru
      _
    // Predicated region
    $region14: #{tpu_custom_call.1} parent=1 // pred_check
      _
    $region15: #{tpu_custom_call.1} parent=1 // pred_check_branch
      %26 = sbr.rel (0) target = $region17
    $region16: #{tpu_custom_call.1} parent=1 // pred_region
      _
    $region17: #{tpu_custom_call.1} parent=1 // pred_fallthru
      _
    // Predicated region
    $region18: #{tpu_custom_call.1} parent=1 // pred_check
      _
    $region19: #{tpu_custom_call.1} parent=1 // pred_check_branch
      %28 = sbr.rel (0) target = $region21
    $region20: #{tpu_custom_call.1} parent=1 // pred_region
      _
    $region21: #{tpu_custom_call.1} parent=1 // pred_fallthru
      _
    // Predicated region
    $region22: #{tpu_custom_call.1} parent=1 // pred_check
      _
    $region23: #{tpu_custom_call.1} parent=1 // pred_check_branch
      %30 = sbr.rel (0) target = $region25
    $region24: #{tpu_custom_call.1} parent=1 // pred_region
      _
    $region25: #{tpu_custom_call.1} parent=1 // pred_fallthru
      _
    // Predicated region
    $region26: #{tpu_custom_call.1} parent=1 // pred_check
      _
    $region27: #{tpu_custom_call.1} parent=1 // pred_check_branch
      %32 = sbr.rel (0) target = $region29
    $region28: #{tpu_custom_call.1} parent=1 // pred_region
      _
    $region29: #{tpu_custom_call.1} parent=1 // pred_fallthru
      _
    // Predicated region
    $region30: #{tpu_custom_call.1} parent=1 // pred_check
      _
    $region31: #{tpu_custom_call.1} parent=1 // pred_check_branch
      %34 = sbr.rel (0) target = $region33
    $region32: #{tpu_custom_call.1} parent=1 // pred_region
      _
    $region33: #{tpu_custom_call.1} parent=1 // pred_fallthru
      _
    // Predicated region
    $region34: #{tpu_custom_call.1} parent=1 // pred_check
      _
    $region35: #{tpu_custom_call.1} parent=1 // pred_check_branch
      %36 = sbr.rel (0) target = $region37
    $region36: #{tpu_custom_call.1} parent=1 // pred_region
      _
    $region37: #{tpu_custom_call.1} parent=1 // pred_fallthru
      _
    // Predicated region
    $region38: #{tpu_custom_call.1} parent=1 // pred_check
      _
    $region39: #{tpu_custom_call.1} parent=1 // pred_check_branch
      %38 = sbr.rel (0) target = $region41
    $region40: #{tpu_custom_call.1} parent=1 // pred_region
      _
    $region41: #{tpu_custom_call.1} parent=1 // pred_fallthru
      _
    // Predicated region
    $region42: #{tpu_custom_call.1} parent=1 // pred_check
      _
    $region43: #{tpu_custom_call.1} parent=1 // pred_check_branch
      %40 = sbr.rel (0) target = $region45
    $region44: #{tpu_custom_call.1} parent=1 // pred_region
      _
    $region45: #{tpu_custom_call.1} parent=1 // pred_fallthru
      _
    // Predicated region
    $region46: #{tpu_custom_call.1} parent=1 // pred_check
      _
    $region47: #{tpu_custom_call.1} parent=1 // pred_check_branch
      %42 = sbr.rel (0) target = $region49
    $region48: #{tpu_custom_call.1} parent=1 // pred_region
      _
    $region49: #{tpu_custom_call.1} parent=1 // pred_fallthru
      _
    // Predicated region
    $region50: #{tpu_custom_call.1} parent=1 // pred_check
      _
    $region51: #{tpu_custom_call.1} parent=1 // pred_check_branch
      %44 = sbr.rel (0) target = $region53
    $region52: #{tpu_custom_call.1} parent=1 // pred_region
      _
    $region53: #{tpu_custom_call.1} parent=1 // pred_fallthru
      _
    %v45 = vld [vmem:[%s0] sm:$0xff]
    %v46 = vld [vmem:[%s0 + $0x8] sm:$0xff]
    %v47 = vld [vmem:[%s1] sm:$0xff]
    %v48 = vld [vmem:[%s1 + $0x8] sm:$0xff]
    %v49 = vld [vmem:[%s1 + $0x10] sm:$0xff]
    %v50 = vld [vmem:[%s1 + $0x18] sm:$0xff]
    %v51 = vld [vmem:[%s1 + $0x20] sm:$0xff]
    %v52 = vld [vmem:[%s1 + $0x28] sm:$0xff]
    %v53 = vld [vmem:[%s1 + $0x30] sm:$0xff]
    %v54 = vld [vmem:[%s1 + $0x38] sm:$0xff]
    %v55 = vld [vmem:[%s2] sm:$0xff]
    %v56 = vld [vmem:[%s2 + $0x8] sm:$0xff]
    %v57 = vld [vmem:[%s2 + $0x10] sm:$0xff]
    %v58 = vld [vmem:[%s2 + $0x18] sm:$0xff]
    %v59 = vld [vmem:[%s2 + $0x20] sm:$0xff]
    %v60 = vld [vmem:[%s2 + $0x28] sm:$0xff]
    %v61 = vld [vmem:[%s2 + $0x30] sm:$0xff]
    %v62 = vld [vmem:[%s2 + $0x38] sm:$0xff]
    %64 = vset.pattern.permute.xlu0 0
    %65 = vperm.xlu0 %64, %v55
    %v66 = vpop.permute.xlu0 %65
    %69 = vset.pattern.permute.xlu0 0
    %70 = vperm.xlu0 %69, %v56
    %v71 = vpop.permute.xlu0 %70
    %74 = vset.pattern.permute.xlu0 0
    %75 = vperm.xlu0 %74, %v57
    %v76 = vpop.permute.xlu0 %75
    %79 = vset.pattern.permute.xlu0 0
    %80 = vperm.xlu0 %79, %v58
    %v81 = vpop.permute.xlu0 %80
    %84 = vset.pattern.permute.xlu0 0
    %85 = vperm.xlu0 %84, %v59
    %v86 = vpop.permute.xlu0 %85
    %89 = vset.pattern.permute.xlu0 0
    %90 = vperm.xlu0 %89, %v60
    %v91 = vpop.permute.xlu0 %90
    %94 = vset.pattern.permute.xlu0 0
    %95 = vperm.xlu0 %94, %v61
    %v96 = vpop.permute.xlu0 %95
    %99 = vset.pattern.permute.xlu0 0
    %100 = vperm.xlu0 %99, %v62
    %v101 = vpop.permute.xlu0 %100
    %vm103 = vcmask 130048
    %v105 = vsel %vm103, %v47, 0
    %v108 = vsel %vm103, %v48, 0
    %v111 = vsel %vm103, %v49, 0
    %v114 = vsel %vm103, %v50, 0
    %v117 = vsel %vm103, %v51, 0
    %v120 = vsel %vm103, %v52, 0
    %v123 = vsel %vm103, %v53, 0
    %v126 = vsel %vm103, %v54, 0
    %128 = vmatprep.subr.mxu0 0.0
    %129 = vmatpush1.msra.mxu0 %v45
    %130 = vmatprep.subr.mxu0 0.0
    %131 = vmatpush1.msra.mxu0 %v46
    %132 = vmatprep.subr.mxu0 0.0
    %133 = vmatpush1.msra.mxu0 0.0
    %134 = vmatprep.subr.mxu0 0.0
    %135 = vmatpush1.msra.mxu0 0.0
    %136 = vmatprep.subr.mxu0 0.0
    %137 = vmatpush1.msra.mxu0 0.0
    %138 = vmatprep.subr.mxu0 0.0
    %139 = vmatpush1.msra.mxu0 0.0
    %140 = vmatprep.subr.mxu0 0.0
    %141 = vmatpush1.msra.mxu0 0.0
    %142 = vmatprep.subr.mxu0 0.0
    %143 = vmatpush1.msra.mxu0 0.0
    %144 = vmatprep.subr.mxu0 0.0
    %145 = vmatpush1.msra.mxu0 0.0
    %146 = vmatprep.subr.mxu0 0.0
    %147 = vmatpush1.msra.mxu0 0.0
    %148 = vmatprep.subr.mxu0 0.0
    %149 = vmatpush1.msra.mxu0 0.0
    %150 = vmatprep.subr.mxu0 0.0
    %151 = vmatpush1.msra.mxu0 0.0
    %152 = vmatprep.subr.mxu0 0.0
    %153 = vmatpush1.msra.mxu0 0.0
    %154 = vmatprep.subr.mxu0 0.0
    %155 = vmatpush1.msra.mxu0 0.0
    %156 = vmatprep.subr.mxu0 0.0
    %157 = vmatpush1.msra.mxu0 0.0
    %158 = vmatprep.subr.mxu0 0.0
    %159 = vmatpush1.msra.mxu0 0.0
    %160 = vmatprep.subr.mxu0 0.0
    %161 = vmatpush1.msra.mxu0 0.0
    %162 = vmatprep.subr.mxu0 0.0
    %163 = vmatpush1.msra.mxu0 0.0
    %164 = vmatprep.subr.mxu0 0.0
    %165 = vmatpush1.msra.mxu0 0.0
    %166 = vmatprep.subr.mxu0 0.0
    %167 = vmatpush1.msra.mxu0 0.0
    %168 = vmatprep.subr.mxu0 0.0
    %169 = vmatpush1.msra.mxu0 0.0
    %170 = vmatprep.subr.mxu0 0.0
    %171 = vmatpush1.msra.mxu0 0.0
    %172 = vmatprep.subr.mxu0 0.0
    %173 = vmatpush1.msra.mxu0 0.0
    %174 = vmatprep.subr.mxu0 0.0
    %175 = vmatpush1.msra.mxu0 0.0
    %176 = vmatprep.subr.mxu0 0.0
    %177 = vmatpush1.msra.mxu0 0.0
    %178 = vmatprep.subr.mxu0 0.0
    %179 = vmatpush1.msra.mxu0 0.0
    %180 = vmatprep.subr.mxu0 0.0
    %181 = vmatpush1.msra.mxu0 0.0
    %182 = vmatprep.subr.mxu0 0.0
    %183 = vmatpush1.msra.mxu0 0.0
    %184 = vmatprep.subr.mxu0 0.0
    %185 = vmatpush1.msra.mxu0 0.0
    %186 = vmatprep.subr.mxu0 0.0
    %187 = vmatpush1.msra.mxu0 0.0
    %188 = vmatprep.subr.mxu0 0.0
    %189 = vmatpush1.msra.mxu0 0.0
    %190 = vmatprep.subr.mxu0 0.0
    %191 = vmatpush1.msra.mxu0 0.0
    %192 = vmatprep.mubr.f32.mxu0 0.0
    %193 = vmatmul.mubr.f32.gmra.mrb[0].mxu0 %v105
    %v194 = vpop.f32.mrb[0].mxu0
    %v195 = vadd.f32 %v66, %v194
    %v196 = vpop.f32.mrb[0].mxu0
    %197 = vmatprep.mubr.f32.mxu0 0.0
    %198 = vmatmul.mubr.f32.gmra.mrb[0].mxu0 %v108
    %v199 = vpop.f32.mrb[0].mxu0
    %v200 = vadd.f32 %v71, %v199
    %v201 = vpop.f32.mrb[0].mxu0
    %202 = vmatprep.mubr.f32.mxu0 0.0
    %203 = vmatmul.mubr.f32.gmra.mrb[0].mxu0 %v111
    %v204 = vpop.f32.mrb[0].mxu0
    %v205 = vadd.f32 %v76, %v204
    %v206 = vpop.f32.mrb[0].mxu0
    %207 = vmatprep.mubr.f32.mxu0 0.0
    %208 = vmatmul.mubr.f32.gmra.mrb[0].mxu0 %v114
    %v209 = vpop.f32.mrb[0].mxu0
    %v210 = vadd.f32 %v81, %v209
    %v211 = vpop.f32.mrb[0].mxu0
    %212 = vmatprep.mubr.f32.mxu0 0.0
    %213 = vmatmul.mubr.f32.gmra.mrb[0].mxu0 %v117
    %v214 = vpop.f32.mrb[0].mxu0
    %v215 = vadd.f32 %v86, %v214
    %v216 = vpop.f32.mrb[0].mxu0
    %217 = vmatprep.mubr.f32.mxu0 0.0
    %218 = vmatmul.mubr.f32.gmra.mrb[0].mxu0 %v120
    %v219 = vpop.f32.mrb[0].mxu0
    %v220 = vadd.f32 %v91, %v219
    %v221 = vpop.f32.mrb[0].mxu0
    %222 = vmatprep.mubr.f32.mxu0 0.0
    %223 = vmatmul.mubr.f32.gmra.mrb[0].mxu0 %v123
    %v224 = vpop.f32.mrb[0].mxu0
    %v225 = vadd.f32 %v96, %v224
    %v226 = vpop.f32.mrb[0].mxu0
    %227 = vmatprep.mubr.f32.mxu0 0.0
    %228 = vmatmul.mubr.f32.gmra.mrb[0].mxu0 %v126
    %v229 = vpop.f32.mrb[0].mxu0
    %v230 = vadd.f32 %v101, %v229
    %v231 = vpop.f32.mrb[0].mxu0
    %232 = vdwg.mxu0
    %v233 = vmax.f32 %v195, 0.0
    %v234 = vmax.f32 %v200, 0.0
    %v235 = vmax.f32 %v205, 0.0
    %v236 = vmax.f32 %v210, 0.0
    %v237 = vmax.f32 %v215, 0.0
    %v238 = vmax.f32 %v220, 0.0
    %v239 = vmax.f32 %v225, 0.0
    %v240 = vmax.f32 %v230, 0.0
    %v241 = vld [vmem:[%s3] sm:$0xff]
    %v242 = vld [vmem:[%s3 + $0x8] sm:$0xff]
    %v243 = vld [vmem:[%s3 + $0x10] sm:$0xff]
    %v244 = vld [vmem:[%s3 + $0x18] sm:$0xff]
    %v245 = vld [vmem:[%s4] sm:$0xff]
    %v246 = vld [vmem:[%s4 + $0x8] sm:$0xff]
    %v247 = vld [vmem:[%s4 + $0x10] sm:$0xff]
    %v248 = vld [vmem:[%s4 + $0x18] sm:$0xff]
    %250 = vset.pattern.permute.xlu0 0
    %251 = vperm.xlu0 %250, %v245
    %v252 = vpop.permute.xlu0 %251
    %255 = vset.pattern.permute.xlu0 0
    %256 = vperm.xlu0 %255, %v246
    %v257 = vpop.permute.xlu0 %256
    %260 = vset.pattern.permute.xlu0 0
    %261 = vperm.xlu0 %260, %v247
    %v262 = vpop.permute.xlu0 %261
    %265 = vset.pattern.permute.xlu0 0
    %266 = vperm.xlu0 %265, %v248
    %v267 = vpop.permute.xlu0 %266
    %vm269 = vcmask 523264
    %v271 = vsel %vm269, %v241, 0
    %v274 = vsel %vm269, %v242, 0
    %v277 = vsel %vm269, %v243, 0
    %v280 = vsel %vm269, %v244, 0
    %282 = vmatprep.subr.mxu0 0.0
    %283 = vmatpush1.msra.mxu0 %v233
    %284 = vmatprep.subr.mxu0 0.0
    %285 = vmatpush1.msra.mxu0 %v234
    %286 = vmatprep.subr.mxu0 0.0
    %287 = vmatpush1.msra.mxu0 %v235
    %288 = vmatprep.subr.mxu0 0.0
    %289 = vmatpush1.msra.mxu0 %v236
    %290 = vmatprep.subr.mxu0 0.0
    %291 = vmatpush1.msra.mxu0 %v237
    %292 = vmatprep.subr.mxu0 0.0
    %293 = vmatpush1.msra.mxu0 %v238
    %294 = vmatprep.subr.mxu0 0.0
    %295 = vmatpush1.msra.mxu0 %v239
    %296 = vmatprep.subr.mxu0 0.0
    %297 = vmatpush1.msra.mxu0 %v240
    %298 = vmatprep.subr.mxu0 0.0
    %299 = vmatpush1.msra.mxu0 0.0
    %300 = vmatprep.subr.mxu0 0.0
    %301 = vmatpush1.msra.mxu0 0.0
    %302 = vmatprep.subr.mxu0 0.0
    %303 = vmatpush1.msra.mxu0 0.0
    %304 = vmatprep.subr.mxu0 0.0
    %305 = vmatpush1.msra.mxu0 0.0
    %306 = vmatprep.subr.mxu0 0.0
    %307 = vmatpush1.msra.mxu0 0.0
    %308 = vmatprep.subr.mxu0 0.0
    %309 = vmatpush1.msra.mxu0 0.0
    %310 = vmatprep.subr.mxu0 0.0
    %311 = vmatpush1.msra.mxu0 0.0
    %312 = vmatprep.subr.mxu0 0.0
    %313 = vmatpush1.msra.mxu0 0.0
    %314 = vmatprep.subr.mxu0 0.0
    %315 = vmatpush1.msra.mxu0 0.0
    %316 = vmatprep.subr.mxu0 0.0
    %317 = vmatpush1.msra.mxu0 0.0
    %318 = vmatprep.subr.mxu0 0.0
    %319 = vmatpush1.msra.mxu0 0.0
    %320 = vmatprep.subr.mxu0 0.0
    %321 = vmatpush1.msra.mxu0 0.0
    %322 = vmatprep.subr.mxu0 0.0
    %323 = vmatpush1.msra.mxu0 0.0
    %324 = vmatprep.subr.mxu0 0.0
    %325 = vmatpush1.msra.mxu0 0.0
    %326 = vmatprep.subr.mxu0 0.0
    %327 = vmatpush1.msra.mxu0 0.0
    %328 = vmatprep.subr.mxu0 0.0
    %329 = vmatpush1.msra.mxu0 0.0
    %330 = vmatprep.subr.mxu0 0.0
    %331 = vmatpush1.msra.mxu0 0.0
    %332 = vmatprep.subr.mxu0 0.0
    %333 = vmatpush1.msra.mxu0 0.0
    %334 = vmatprep.subr.mxu0 0.0
    %335 = vmatpush1.msra.mxu0 0.0
    %336 = vmatprep.subr.mxu0 0.0
    %337 = vmatpush1.msra.mxu0 0.0
    %338 = vmatprep.subr.mxu0 0.0
    %339 = vmatpush1.msra.mxu0 0.0
    %340 = vmatprep.subr.mxu0 0.0
    %341 = vmatpush1.msra.mxu0 0.0
    %342 = vmatprep.subr.mxu0 0.0
    %343 = vmatpush1.msra.mxu0 0.0
    %344 = vmatprep.subr.mxu0 0.0
    %345 = vmatpush1.msra.mxu0 0.0
    %346 = vmatprep.mubr.f32.mxu0 0.0
    %347 = vmatmul.mubr.f32.gmra.mrb[0].mxu0 %v271
    %v348 = vpop.f32.mrb[0].mxu0
    %v349 = vadd.f32 %v252, %v348
    %v350 = vpop.f32.mrb[0].mxu0
    %351 = vmatprep.mubr.f32.mxu0 0.0
    %352 = vmatmul.mubr.f32.gmra.mrb[0].mxu0 %v274
    %v353 = vpop.f32.mrb[0].mxu0
    %v354 = vadd.f32 %v257, %v353
    %v355 = vpop.f32.mrb[0].mxu0
    %356 = vmatprep.mubr.f32.mxu0 0.0
    %357 = vmatmul.mubr.f32.gmra.mrb[0].mxu0 %v277
    %v358 = vpop.f32.mrb[0].mxu0
    %v359 = vadd.f32 %v262, %v358
    %v360 = vpop.f32.mrb[0].mxu0
    %361 = vmatprep.mubr.f32.mxu0 0.0
    %362 = vmatmul.mubr.f32.gmra.mrb[0].mxu0 %v280
    %v363 = vpop.f32.mrb[0].mxu0
    %v364 = vadd.f32 %v267, %v363
    %v365 = vpop.f32.mrb[0].mxu0
    %366 = vdwg.mxu0
    %v367 = vmax.f32 %v349, 0.0
    %v368 = vmax.f32 %v354, 0.0
    %v369 = vmax.f32 %v359, 0.0
    %v370 = vmax.f32 %v364, 0.0
    %v371 = vld [vmem:[%s5] sm:$0xff]
    %v372 = vld [vmem:[%s5 + $0x8] sm:$0xff]
    %v373 = vld [vmem:[%s6] sm:$0xff]
    %v374 = vld [vmem:[%s6 + $0x8] sm:$0xff]
    %376 = vset.pattern.permute.xlu0 0
    %377 = vperm.xlu0 %376, %v373
    %v378 = vpop.permute.xlu0 %377
    %381 = vset.pattern.permute.xlu0 0
    %382 = vperm.xlu0 %381, %v374
    %v383 = vpop.permute.xlu0 %382
    %vm385 = vcmask 261120
    %v387 = vsel %vm385, %v371, 0
    %v390 = vsel %vm385, %v372, 0
    %392 = vmatprep.subr.mxu0 0.0
    %393 = vmatpush1.msra.mxu0 %v367
    %394 = vmatprep.subr.mxu0 0.0
    %395 = vmatpush1.msra.mxu0 %v368
    %396 = vmatprep.subr.mxu0 0.0
    %397 = vmatpush1.msra.mxu0 %v369
    %398 = vmatprep.subr.mxu0 0.0
    %399 = vmatpush1.msra.mxu0 %v370
    %400 = vmatprep.subr.mxu0 0.0
    %401 = vmatpush1.msra.mxu0 0.0
    %402 = vmatprep.subr.mxu0 0.0
    %403 = vmatpush1.msra.mxu0 0.0
    %404 = vmatprep.subr.mxu0 0.0
    %405 = vmatpush1.msra.mxu0 0.0
    %406 = vmatprep.subr.mxu0 0.0
    %407 = vmatpush1.msra.mxu0 0.0
    %408 = vmatprep.subr.mxu0 0.0
    %409 = vmatpush1.msra.mxu0 0.0
    %410 = vmatprep.subr.mxu0 0.0
    %411 = vmatpush1.msra.mxu0 0.0
    %412 = vmatprep.subr.mxu0 0.0
    %413 = vmatpush1.msra.mxu0 0.0
    %414 = vmatprep.subr.mxu0 0.0
    %415 = vmatpush1.msra.mxu0 0.0
    %416 = vmatprep.subr.mxu0 0.0
    %417 = vmatpush1.msra.mxu0 0.0
    %418 = vmatprep.subr.mxu0 0.0
    %419 = vmatpush1.msra.mxu0 0.0
    %420 = vmatprep.subr.mxu0 0.0
    %421 = vmatpush1.msra.mxu0 0.0
    %422 = vmatprep.subr.mxu0 0.0
    %423 = vmatpush1.msra.mxu0 0.0
    %424 = vmatprep.subr.mxu0 0.0
    %425 = vmatpush1.msra.mxu0 0.0
    %426 = vmatprep.subr.mxu0 0.0
    %427 = vmatpush1.msra.mxu0 0.0
    %428 = vmatprep.subr.mxu0 0.0
    %429 = vmatpush1.msra.mxu0 0.0
    %430 = vmatprep.subr.mxu0 0.0
    %431 = vmatpush1.msra.mxu0 0.0
    %432 = vmatprep.subr.mxu0 0.0
    %433 = vmatpush1.msra.mxu0 0.0
    %434 = vmatprep.subr.mxu0 0.0
    %435 = vmatpush1.msra.mxu0 0.0
    %436 = vmatprep.subr.mxu0 0.0
    %437 = vmatpush1.msra.mxu0 0.0
    %438 = vmatprep.subr.mxu0 0.0
    %439 = vmatpush1.msra.mxu0 0.0
    %440 = vmatprep.subr.mxu0 0.0
    %441 = vmatpush1.msra.mxu0 0.0
    %442 = vmatprep.subr.mxu0 0.0
    %443 = vmatpush1.msra.mxu0 0.0
    %444 = vmatprep.subr.mxu0 0.0
    %445 = vmatpush1.msra.mxu0 0.0
    %446 = vmatprep.subr.mxu0 0.0
    %447 = vmatpush1.msra.mxu0 0.0
    %448 = vmatprep.subr.mxu0 0.0
    %449 = vmatpush1.msra.mxu0 0.0
    %450 = vmatprep.subr.mxu0 0.0
    %451 = vmatpush1.msra.mxu0 0.0
    %452 = vmatprep.subr.mxu0 0.0
    %453 = vmatpush1.msra.mxu0 0.0
    %454 = vmatprep.subr.mxu0 0.0
    %455 = vmatpush1.msra.mxu0 0.0
    %456 = vmatprep.mubr.f32.mxu0 0.0
    %457 = vmatmul.mubr.f32.gmra.mrb[0].mxu0 %v387
    %v458 = vpop.f32.mrb[0].mxu0
    %v459 = vadd.f32 %v378, %v458
    %v460 = vpop.f32.mrb[0].mxu0
    %461 = vmatprep.mubr.f32.mxu0 0.0
    %462 = vmatmul.mubr.f32.gmra.mrb[0].mxu0 %v390
    %v463 = vpop.f32.mrb[0].mxu0
    %v464 = vadd.f32 %v383, %v463
    %v465 = vpop.f32.mrb[0].mxu0
    %466 = vdwg.mxu0
    %v467 = vmax.f32 %v459, 0.0
    %v468 = vmax.f32 %v464, 0.0
    %v469 = vld [vmem:[%s7] sm:$0xff]
    %v470 = vld [vmem:[%s8] sm:$0xff]
    %472 = vset.pattern.permute.xlu0 0
    %473 = vperm.xlu0 %472, %v470
    %v474 = vpop.permute.xlu0 %473
    %v477 = vsel %vm103, %v469, 0
    %479 = vmatprep.subr.mxu0 0.0
    %480 = vmatpush1.msra.mxu0 %v467
    %481 = vmatprep.subr.mxu0 0.0
    %482 = vmatpush1.msra.mxu0 %v468
    %483 = vmatprep.subr.mxu0 0.0
    %484 = vmatpush1.msra.mxu0 0.0
    %485 = vmatprep.subr.mxu0 0.0
    %486 = vmatpush1.msra.mxu0 0.0
    %487 = vmatprep.subr.mxu0 0.0
    %488 = vmatpush1.msra.mxu0 0.0
    %489 = vmatprep.subr.mxu0 0.0
    %490 = vmatpush1.msra.mxu0 0.0
    %491 = vmatprep.subr.mxu0 0.0
    %492 = vmatpush1.msra.mxu0 0.0
    %493 = vmatprep.subr.mxu0 0.0
    %494 = vmatpush1.msra.mxu0 0.0
    %495 = vmatprep.subr.mxu0 0.0
    %496 = vmatpush1.msra.mxu0 0.0
    %497 = vmatprep.subr.mxu0 0.0
    %498 = vmatpush1.msra.mxu0 0.0
    %499 = vmatprep.subr.mxu0 0.0
    %500 = vmatpush1.msra.mxu0 0.0
    %501 = vmatprep.subr.mxu0 0.0
    %502 = vmatpush1.msra.mxu0 0.0
    %503 = vmatprep.subr.mxu0 0.0
    %504 = vmatpush1.msra.mxu0 0.0
    %505 = vmatprep.subr.mxu0 0.0
    %506 = vmatpush1.msra.mxu0 0.0
    %507 = vmatprep.subr.mxu0 0.0
    %508 = vmatpush1.msra.mxu0 0.0
    %509 = vmatprep.subr.mxu0 0.0
    %510 = vmatpush1.msra.mxu0 0.0
    %511 = vmatprep.subr.mxu0 0.0
    %512 = vmatpush1.msra.mxu0 0.0
    %513 = vmatprep.subr.mxu0 0.0
    %514 = vmatpush1.msra.mxu0 0.0
    %515 = vmatprep.subr.mxu0 0.0
    %516 = vmatpush1.msra.mxu0 0.0
    %517 = vmatprep.subr.mxu0 0.0
    %518 = vmatpush1.msra.mxu0 0.0
    %519 = vmatprep.subr.mxu0 0.0
    %520 = vmatpush1.msra.mxu0 0.0
    %521 = vmatprep.subr.mxu0 0.0
    %522 = vmatpush1.msra.mxu0 0.0
    %523 = vmatprep.subr.mxu0 0.0
    %524 = vmatpush1.msra.mxu0 0.0
    %525 = vmatprep.subr.mxu0 0.0
    %526 = vmatpush1.msra.mxu0 0.0
    %527 = vmatprep.subr.mxu0 0.0
    %528 = vmatpush1.msra.mxu0 0.0
    %529 = vmatprep.subr.mxu0 0.0
    %530 = vmatpush1.msra.mxu0 0.0
    %531 = vmatprep.subr.mxu0 0.0
    %532 = vmatpush1.msra.mxu0 0.0
    %533 = vmatprep.subr.mxu0 0.0
    %534 = vmatpush1.msra.mxu0 0.0
    %535 = vmatprep.subr.mxu0 0.0
    %536 = vmatpush1.msra.mxu0 0.0
    %537 = vmatprep.subr.mxu0 0.0
    %538 = vmatpush1.msra.mxu0 0.0
    %539 = vmatprep.subr.mxu0 0.0
    %540 = vmatpush1.msra.mxu0 0.0
    %541 = vmatprep.subr.mxu0 0.0
    %542 = vmatpush1.msra.mxu0 0.0
    %543 = vmatprep.mubr.f32.mxu0 0.0
    %544 = vmatmul.mubr.f32.gmra.mrb[0].mxu0 %v477
    %v545 = vpop.f32.mrb[0].mxu0
    %v546 = vadd.f32 %v474, %v545
    %v547 = vpop.f32.mrb[0].mxu0
    %548 = vdwg.mxu0
    %v549 = vmax.f32 %v546, 0.0
    %v550 = vld [vmem:[%s9] sm:$0xf]
    %v551 = vld [vmem:[%s10] sm:$0xf]
    %553 = vset.pattern.permute.xlu0 0
    %554 = vperm.xlu0 %553, %v551
    %v555 = vpop.permute.xlu0 %554
    %vm557 = vcmask 64512
    %v559 = vsel %vm557, %v550, 0
    %561 = vmatprep.subr.mxu0 0.0
    %562 = vmatpush1.msra.mxu0 %v549
    %563 = vmatprep.subr.mxu0 0.0
    %564 = vmatpush1.msra.mxu0 0.0
    %565 = vmatprep.subr.mxu0 0.0
    %566 = vmatpush1.msra.mxu0 0.0
    %567 = vmatprep.subr.mxu0 0.0
    %568 = vmatpush1.msra.mxu0 0.0
    %569 = vmatprep.subr.mxu0 0.0
    %570 = vmatpush1.msra.mxu0 0.0
    %571 = vmatprep.subr.mxu0 0.0
    %572 = vmatpush1.msra.mxu0 0.0
    %573 = vmatprep.subr.mxu0 0.0
    %574 = vmatpush1.msra.mxu0 0.0
    %575 = vmatprep.subr.mxu0 0.0
    %576 = vmatpush1.msra.mxu0 0.0
    %577 = vmatprep.subr.mxu0 0.0
    %578 = vmatpush1.msra.mxu0 0.0
    %579 = vmatprep.subr.mxu0 0.0
    %580 = vmatpush1.msra.mxu0 0.0
    %581 = vmatprep.subr.mxu0 0.0
    %582 = vmatpush1.msra.mxu0 0.0
    %583 = vmatprep.subr.mxu0 0.0
    %584 = vmatpush1.msra.mxu0 0.0
    %585 = vmatprep.subr.mxu0 0.0
    %586 = vmatpush1.msra.mxu0 0.0
    %587 = vmatprep.subr.mxu0 0.0
    %588 = vmatpush1.msra.mxu0 0.0
    %589 = vmatprep.subr.mxu0 0.0
    %590 = vmatpush1.msra.mxu0 0.0
    %591 = vmatprep.subr.mxu0 0.0
    %592 = vmatpush1.msra.mxu0 0.0
    %593 = vmatprep.subr.mxu0 0.0
    %594 = vmatpush1.msra.mxu0 0.0
    %595 = vmatprep.subr.mxu0 0.0
    %596 = vmatpush1.msra.mxu0 0.0
    %597 = vmatprep.subr.mxu0 0.0
    %598 = vmatpush1.msra.mxu0 0.0
    %599 = vmatprep.subr.mxu0 0.0
    %600 = vmatpush1.msra.mxu0 0.0
    %601 = vmatprep.subr.mxu0 0.0
    %602 = vmatpush1.msra.mxu0 0.0
    %603 = vmatprep.subr.mxu0 0.0
    %604 = vmatpush1.msra.mxu0 0.0
    %605 = vmatprep.subr.mxu0 0.0
    %606 = vmatpush1.msra.mxu0 0.0
    %607 = vmatprep.subr.mxu0 0.0
    %608 = vmatpush1.msra.mxu0 0.0
    %609 = vmatprep.subr.mxu0 0.0
    %610 = vmatpush1.msra.mxu0 0.0
    %611 = vmatprep.subr.mxu0 0.0
    %612 = vmatpush1.msra.mxu0 0.0
    %613 = vmatprep.subr.mxu0 0.0
    %614 = vmatpush1.msra.mxu0 0.0
    %615 = vmatprep.subr.mxu0 0.0
    %616 = vmatpush1.msra.mxu0 0.0
    %617 = vmatprep.subr.mxu0 0.0
    %618 = vmatpush1.msra.mxu0 0.0
    %619 = vmatprep.subr.mxu0 0.0
    %620 = vmatpush1.msra.mxu0 0.0
    %621 = vmatprep.subr.mxu0 0.0
    %622 = vmatpush1.msra.mxu0 0.0
    %623 = vmatprep.subr.mxu0 0.0
    %624 = vmatpush1.msra.mxu0 0.0
    %625 = vmatprep.mubr.f32.mxu0 0.0
    %626 = vmatmul.mubr.f32.gmra.mrb[0].mxu0 %v559
    %v627 = vpop.f32.mrb[0].mxu0
    %v628 = vadd.f32 %v555, %v627
    %v629 = vpop.f32.mrb[0].mxu0
    %630 = vdwg.mxu0
    %v631 = vmax.f32 %v628, 0.0
    %v632 = vld [vmem:[%s11] sm:$0x3]
    %v633 = vld [vmem:[%s12] sm:$0x3]
    %635 = vset.pattern.permute.xlu0 0
    %636 = vperm.xlu0 %635, %v633
    %v637 = vpop.permute.xlu0 %636
    %vm639 = vcmask 31744
    %v641 = vsel %vm639, %v632, 0
    %vm643 = vcmask 1043456
    %v645 = vsel %vm643, %v631, 0
    %647 = vmatprep.subr.mxu0 0.0
    %648 = vmatpush1.msra.mxu0 %v645
    %649 = vmatprep.subr.mxu0 0.0
    %650 = vmatpush1.msra.mxu0 0.0
    %651 = vmatprep.subr.mxu0 0.0
    %652 = vmatpush1.msra.mxu0 0.0
    %653 = vmatprep.subr.mxu0 0.0
    %654 = vmatpush1.msra.mxu0 0.0
    %655 = vmatprep.subr.mxu0 0.0
    %656 = vmatpush1.msra.mxu0 0.0
    %657 = vmatprep.subr.mxu0 0.0
    %658 = vmatpush1.msra.mxu0 0.0
    %659 = vmatprep.subr.mxu0 0.0
    %660 = vmatpush1.msra.mxu0 0.0
    %661 = vmatprep.subr.mxu0 0.0
    %662 = vmatpush1.msra.mxu0 0.0
    %663 = vmatprep.subr.mxu0 0.0
    %664 = vmatpush1.msra.mxu0 0.0
    %665 = vmatprep.subr.mxu0 0.0
    %666 = vmatpush1.msra.mxu0 0.0
    %667 = vmatprep.subr.mxu0 0.0
    %668 = vmatpush1.msra.mxu0 0.0
    %669 = vmatprep.subr.mxu0 0.0
    %670 = vmatpush1.msra.mxu0 0.0
    %671 = vmatprep.subr.mxu0 0.0
    %672 = vmatpush1.msra.mxu0 0.0
    %673 = vmatprep.subr.mxu0 0.0
    %674 = vmatpush1.msra.mxu0 0.0
    %675 = vmatprep.subr.mxu0 0.0
    %676 = vmatpush1.msra.mxu0 0.0
    %677 = vmatprep.subr.mxu0 0.0
    %678 = vmatpush1.msra.mxu0 0.0
    %679 = vmatprep.subr.mxu0 0.0
    %680 = vmatpush1.msra.mxu0 0.0
    %681 = vmatprep.subr.mxu0 0.0
    %682 = vmatpush1.msra.mxu0 0.0
    %683 = vmatprep.subr.mxu0 0.0
    %684 = vmatpush1.msra.mxu0 0.0
    %685 = vmatprep.subr.mxu0 0.0
    %686 = vmatpush1.msra.mxu0 0.0
    %687 = vmatprep.subr.mxu0 0.0
    %688 = vmatpush1.msra.mxu0 0.0
    %689 = vmatprep.subr.mxu0 0.0
    %690 = vmatpush1.msra.mxu0 0.0
    %691 = vmatprep.subr.mxu0 0.0
    %692 = vmatpush1.msra.mxu0 0.0
    %693 = vmatprep.subr.mxu0 0.0
    %694 = vmatpush1.msra.mxu0 0.0
    %695 = vmatprep.subr.mxu0 0.0
    %696 = vmatpush1.msra.mxu0 0.0
    %697 = vmatprep.subr.mxu0 0.0
    %698 = vmatpush1.msra.mxu0 0.0
    %699 = vmatprep.subr.mxu0 0.0
    %700 = vmatpush1.msra.mxu0 0.0
    %701 = vmatprep.subr.mxu0 0.0
    %702 = vmatpush1.msra.mxu0 0.0
    %703 = vmatprep.subr.mxu0 0.0
    %704 = vmatpush1.msra.mxu0 0.0
    %705 = vmatprep.subr.mxu0 0.0
    %706 = vmatpush1.msra.mxu0 0.0
    %707 = vmatprep.subr.mxu0 0.0
    %708 = vmatpush1.msra.mxu0 0.0
    %709 = vmatprep.subr.mxu0 0.0
    %710 = vmatpush1.msra.mxu0 0.0
    %711 = vmatprep.mubr.f32.mxu0 0.0
    %712 = vmatmul.mubr.f32.gmra.mrb[0].mxu0 %v641
    %v713 = vpop.f32.mrb[0].mxu0
    %v714 = vadd.f32 %v637, %v713
    %v715 = vpop.f32.mrb[0].mxu0
    %716 = vdwg.mxu0
    %717 = vst [vmem:[#allocation2] sm:$0x3] %v714
    // Predicated region
    $region54: #{tpu_custom_call.1} parent=1 // pred_check
      _
    $region55: #{tpu_custom_call.1} parent=1 // pred_check_branch
      %719 = sbr.rel (0) target = $region57
    $region56: #{tpu_custom_call.1} parent=1 // pred_region
      %s721 = ssub.s32 32, 32
      %722 = vsyncadd [#allocation3], %s721
      %s724 = sshll.u32 [#allocation2], 4
      %s725 = int_to_ptr.vmem [resolvable:$true] %s724
      %727 = dma.vmem_to_hbm [thread:$0]  %s725, 32, %s13, [#allocation3]
    $region57: #{tpu_custom_call.1} parent=1 // pred_fallthru
      _
    // Predicated region
    $region58: #{tpu_custom_call.1} parent=1 // pred_check
      _
    $region59: #{tpu_custom_call.1} parent=1 // pred_check_branch
      %729 = sbr.rel (0) target = $region61
    $region60: #{tpu_custom_call.1} parent=1 // pred_region
      %730 = dma.done [#allocation3], 32
    $region61: #{tpu_custom_call.1} parent=1 // pred_fallthru
      _
    %731 = vsyncpa [#allocation3], 1

</llo_original>
